<compile_context>
chip_gen: v7x
topology: tpu7x:2x2x1
jax: 0.10.0
libtpu: 0.0.40
codegen_flags: <defaults>
</compile_context>

<pallas_src>
import functools

import jax
import jax.numpy as jnp
from jax.experimental import pallas as pl
from jax.experimental.pallas import tpu as pltpu


# ---------------------------------------------------------------------------
# Kernels
# ---------------------------------------------------------------------------

def _c2b_kernel_two(x_ref, code_ref, inv1_ref, inv0_ref, b1_ref, b0_ref):
    # x_ref:    (Nb, C, T)  batch block x spatial tile
    # code_ref: (C, T)      bf16 0/1 code tile (resident across the batch axis)
    # inv*_ref: (1, T)      precomputed reciprocal denominators
    # b*_ref:   (Nb, T)     sublane-dense outputs
    x = x_ref[...]                                      # (Nb, C, T) f32
    sel = (code_ref[...] != 0)[None, :, :]              # bool (1, C, T), no cast
    x1 = jnp.where(sel, x, 0.0)                         # code-selected samples
    num1 = jnp.sum(x1, axis=1)                          # (Nb, T)
    num0 = jnp.sum(x - x1, axis=1)                      # exact complement sum
    b1_ref[...] = num1 * inv1_ref[...]
    b0_ref[...] = num0 * inv0_ref[...]


def _c2b_kernel_one(x_ref, code_ref, inv1_ref, b1_ref):
    x = x_ref[...]
    sel = (code_ref[...] != 0)[None, :, :]
    num1 = jnp.sum(jnp.where(sel, x, 0.0), axis=1)      # (Nb, T)
    b1_ref[...] = num1 * inv1_ref[...]


# ---------------------------------------------------------------------------
# Host-side helpers
# ---------------------------------------------------------------------------

def make_c2b_code(block_size, sub_frames, key, p=0.2):
    """Deterministic stand-in for torch.empty(...).bernoulli_(p=0.2)."""
    bern = jax.random.bernoulli(key, p=p,
                                shape=(1, sub_frames, block_size, block_size))
    return bern.astype(jnp.float32)


def prepare_code(code, H, W, dtype=jnp.float32):
    """Precompute call-invariant quantities once, outside the hot path.

    Returns:
      code2d   : (C, H*W) bf16 spatially-tiled code (0/1 exact in bf16)
      inv_den1 : (1, H*W) 1 / sum(code)       (dtype)
      inv_den0 : (1, H*W) 1 / (C - sum(code)) (dtype)
    """
    _, C, bs, _ = code.shape
    code_repeat = jnp.tile(code, (1, 1, H // bs, W // bs))   # (1, C, H, W)
    code2d = code_repeat.reshape(C, H * W)                   # (C, HW) f32
    den1 = jnp.sum(code2d, axis=0, keepdims=True)            # (1, HW)
    inv_den1 = (1.0 / den1).astype(dtype)
    inv_den0 = (1.0 / (jnp.float32(C) - den1)).astype(dtype)
    return code2d.astype(jnp.bfloat16), inv_den1, inv_den0


def _cdiv(a, b):
    return -(-a // b)


# Per-step x working set target: multiple MiB so HBM time dominates the fixed
# ~0.35 us per-step overhead on every generation (feedback: 4-8 MiB for v7x).
_TARGET_X_BLOCK_BYTES = 6 * 1024 * 1024
_VMEM_LIMIT_BYTES = 32 * 1024 * 1024   # raises v5e's 16 MiB scoped default


def _choose_tiling(N, C, HW, itemsize=4):
    """Pick (Nb, N_pad, tile, HW_pad) from a per-step byte budget."""
    Nb = min(N, 8)                         # batch block (<= 8 sublanes of output)
    N_pad = _cdiv(N, Nb) * Nb              # Nb == N when N <= 8, else 8 | N_pad
    tile = _TARGET_X_BLOCK_BYTES // (Nb * C * itemsize)
    tile = max(128, (tile // 128) * 128)   # lane-aligned
    tile = min(tile, _cdiv(HW, 128) * 128)
    HW_pad = _cdiv(HW, tile) * tile
    return Nb, N_pad, tile, HW_pad


# ---------------------------------------------------------------------------
# Forward
# ---------------------------------------------------------------------------

@functools.partial(jax.jit, static_argnames=("two_bucket",))
def c2b_forward(x, code2d, inv_den1, inv_den0=None, *, two_bucket=False):
    """x: (N, C, H, W) f32; code2d/inv_den* from prepare_code()."""
    N, C, H, W = x.shape
    HW = H * W
    Nb, N_pad, tile, HW_pad = _choose_tiling(N, C, HW, x.dtype.itemsize)

    x3d = x.reshape(N, C, HW)
    # Pad to tiling-friendly extents (no-ops for the common aligned case);
    # padded rows/columns are computed on garbage and sliced off afterwards.
    if N_pad != N or HW_pad != HW:
        x3d = jnp.pad(x3d, ((0, N_pad - N), (0, 0), (0, HW_pad - HW)))
    if HW_pad != HW:
        code2d = jnp.pad(code2d, ((0, 0), (0, HW_pad - HW)))
        inv_den1 = jnp.pad(inv_den1, ((0, 0), (0, HW_pad - HW)))
        if two_bucket:
            inv_den0 = jnp.pad(inv_den0, ((0, 0), (0, HW_pad - HW)))

    nt = HW_pad // tile
    nbg = N_pad // Nb

    # Grid: spatial (outer, "parallel" -> megacore-sharded on v7x), batch
    # (inner, "arbitrary" -> sequential, so code/inv tiles stay resident and
    # are DMA'd once per spatial tile instead of once per step).
    in_specs = [
        pl.BlockSpec((Nb, C, tile), lambda j, i: (i, 0, j)),   # x
        pl.BlockSpec((C, tile), lambda j, i: (0, j)),          # code (bf16)
        pl.BlockSpec((1, tile), lambda j, i: (0, j)),          # inv_den1
    ]
    inputs = [x3d, code2d, inv_den1]

    out_shape_b = jax.ShapeDtypeStruct((N_pad, HW_pad), x.dtype)
    out_spec_b = pl.BlockSpec((Nb, tile), lambda j, i: (i, j))  # sublane-dense

    if two_bucket:
        in_specs.append(pl.BlockSpec((1, tile), lambda j, i: (0, j)))  # inv_den0
        inputs.append(inv_den0)
        kernel = _c2b_kernel_two
        out_shapes = (out_shape_b, out_shape_b)
        out_specs = (out_spec_b, out_spec_b)
    else:
        kernel = _c2b_kernel_one
        out_shapes = out_shape_b
        out_specs = out_spec_b

    result = pl.pallas_call(
        kernel,
        out_shape=out_shapes,
        grid_spec=pltpu.PrefetchScalarGridSpec(
            num_scalar_prefetch=0,
            grid=(nt, nbg),
            in_specs=in_specs,
            out_specs=out_specs,
        ),
        compiler_params=pltpu.CompilerParams(
            dimension_semantics=("parallel", "arbitrary"),
            vmem_limit_bytes=_VMEM_LIMIT_BYTES,
        ),
    )(*inputs)

    def _finish(b):
        return b[:N, :HW].reshape(N, 1, H, W)

    if two_bucket:
        b1, b0 = result
        return _finish(b1), _finish(b0)
    return _finish(result)


# ---------------------------------------------------------------------------
# Pure-JAX reference (mirrors the PyTorch forward)
# ---------------------------------------------------------------------------

def c2b_reference(x, code, block_size, two_bucket):
    N, C, H, W = x.shape
    code_repeat = jnp.tile(code, (1, 1, H // block_size, W // block_size))
    b1 = jnp.sum(code_repeat * x, axis=1, keepdims=True) / jnp.sum(
        code_repeat, axis=1, keepdims=True)
    if not two_bucket:
        return b1
    comp = 1.0 - code_repeat
    b0 = jnp.sum(comp * x, axis=1, keepdims=True) / jnp.sum(
        comp, axis=1, keepdims=True)
    return b1, b0


if __name__ == "__main__":
    block_size = 8
    sub_frames = 16       # channel dim of x must equal sub_frames
    N, H, W = 2, 16, 16

    root = jax.random.PRNGKey(0)
    k_code, k_x = jax.random.split(root)

    code = make_c2b_code(block_size, sub_frames, k_code)          # (1, 16, 8, 8)
    x = jax.random.uniform(k_x, (N, sub_frames, H, W), jnp.float32)

    # Hoisted (call-invariant) preprocessing: tiled bf16 code + reciprocal dens.
    code2d, inv_den1, inv_den0 = prepare_code(code, H, W)

    # two-bucket path exercises the full forward semantics
    b1, b0 = c2b_forward(x, code2d, inv_den1, inv_den0, two_bucket=True)
    b1 = jax.block_until_ready(b1)
    b0 = jax.block_until_ready(b0)

    # sanity-check against the pure-JAX reference (NaN from all-zero / all-one
    # code columns matches PyTorch 0/0 — compare with equal_nan).
    r1, r0 = c2b_reference(x, code, block_size, True)
    assert bool(jnp.allclose(b1, r1, atol=1e-5, equal_nan=True))
    assert bool(jnp.allclose(b0, r0, atol=1e-5, equal_nan=True))

    # single-bucket path too
    b1_only = jax.block_until_ready(
        c2b_forward(x, code2d, inv_den1, two_bucket=False))
    assert bool(jnp.allclose(b1_only, r1, atol=1e-5, equal_nan=True))

    print("KERNEL_OK")
</pallas_src>

<mosaic_0001>
module attributes {stable_mosaic.version = 11 : i64} {
  func.func @_c2b_kernel_two(%arg0: i32, %arg1: i32, %arg2: memref<2x16x256xf32, #tpu.memory_space<vmem>>, %arg3: memref<16x256xbf16, #tpu.memory_space<vmem>>, %arg4: memref<1x256xf32, #tpu.memory_space<vmem>>, %arg5: memref<1x256xf32, #tpu.memory_space<vmem>>, %arg6: memref<2x256xf32, #tpu.memory_space<vmem>>, %arg7: memref<2x256xf32, #tpu.memory_space<vmem>>) attributes {dimension_semantics = [#tpu.dimension_semantics<parallel>, #tpu.dimension_semantics<arbitrary>], iteration_bounds = array<i64: 1, 1>, scalar_prefetch = 0 : i64, scratch_operands = 0 : i64, tpu.core_type = #tpu.core_type<tc>, window_params = [{transform_indices = @transform_0, window_bounds = array<i64: 2, 16, 256>}, {transform_indices = @transform_1, window_bounds = array<i64: 16, 256>}, {transform_indices = @transform_2, window_bounds = array<i64: 1, 256>}, {transform_indices = @transform_3, window_bounds = array<i64: 1, 256>}, {transform_indices = @transform_4, window_bounds = array<i64: 2, 256>}, {transform_indices = @transform_5, window_bounds = array<i64: 2, 256>}]} {
    %c0 = arith.constant 0 : index
    %c0_0 = arith.constant 0 : index
    %c0_1 = arith.constant 0 : index
    %0 = vector.load %arg2[%c0, %c0_0, %c0_1] : memref<2x16x256xf32, #tpu.memory_space<vmem>>, vector<2x16x256xf32>
    %c0_2 = arith.constant 0 : index
    %c0_3 = arith.constant 0 : index
    %1 = vector.load %arg3[%c0_2, %c0_3] : memref<16x256xbf16, #tpu.memory_space<vmem>>, vector<16x256xbf16>
    %cst = arith.constant 0.000000e+00 : bf16
    %2 = vector.broadcast %cst : bf16 to vector<16x256xbf16>
    %3 = arith.cmpf one, %1, %2 : vector<16x256xbf16>
    %4 = vector.shape_cast %3 : vector<16x256xi1> to vector<1x16x256xi1>
    %cst_4 = arith.constant 0.000000e+00 : f32
    %5 = vector.shape_cast %4 : vector<1x16x256xi1> to vector<1x16x256xi1>
    %6 = vector.broadcast %5 : vector<1x16x256xi1> to vector<2x16x256xi1>
    %7 = vector.broadcast %cst_4 : f32 to vector<2x16x256xf32>
    %8 = arith.select %6, %0, %7 : vector<2x16x256xi1>, vector<2x16x256xf32>
    %cst_5 = arith.constant dense<0.000000e+00> : vector<2x256xf32>
    %9 = vector.multi_reduction <add>, %8, %cst_5 [1] : vector<2x16x256xf32> to vector<2x256xf32>
    %10 = arith.subf %0, %8 : vector<2x16x256xf32>
    %cst_6 = arith.constant dense<0.000000e+00> : vector<2x256xf32>
    %11 = vector.multi_reduction <add>, %10, %cst_6 [1] : vector<2x16x256xf32> to vector<2x256xf32>
    %c0_7 = arith.constant 0 : index
    %c0_8 = arith.constant 0 : index
    %12 = vector.load %arg4[%c0_7, %c0_8] : memref<1x256xf32, #tpu.memory_space<vmem>>, vector<1x256xf32>
    %13 = vector.broadcast %12 : vector<1x256xf32> to vector<2x256xf32>
    %14 = arith.mulf %9, %13 : vector<2x256xf32>
    %c0_9 = arith.constant 0 : index
    %c0_10 = arith.constant 0 : index
    %15 = vector.load %arg6[%c0_9, %c0_10] : memref<2x256xf32, #tpu.memory_space<vmem>>, vector<2x256xf32>
    tpu.vector_store %arg6[%c0_9, %c0_10], %14 {strides = array<i32>} : memref<2x256xf32, #tpu.memory_space<vmem>>, vector<2x256xf32>,
    %c0_11 = arith.constant 0 : index
    %c0_12 = arith.constant 0 : index
    %16 = vector.load %arg5[%c0_11, %c0_12] : memref<1x256xf32, #tpu.memory_space<vmem>>, vector<1x256xf32>
    %17 = vector.broadcast %16 : vector<1x256xf32> to vector<2x256xf32>
    %18 = arith.mulf %11, %17 : vector<2x256xf32>
    %c0_13 = arith.constant 0 : index
    %c0_14 = arith.constant 0 : index
    %19 = vector.load %arg7[%c0_13, %c0_14] : memref<2x256xf32, #tpu.memory_space<vmem>>, vector<2x256xf32>
    tpu.vector_store %arg7[%c0_13, %c0_14], %18 {strides = array<i32>} : memref<2x256xf32, #tpu.memory_space<vmem>>, vector<2x256xf32>,
    return
  }
  func.func @transform_0(%arg0: i32, %arg1: i32) -> (i32, i32, i32) {
    %c0_i32 = arith.constant 0 : i32
    %c0_i32_0 = arith.constant 0 : i32
    return %arg1, %c0_i32, %arg0 : i32, i32, i32
  }
  func.func @transform_1(%arg0: i32, %arg1: i32) -> (i32, i32) {
    %c0_i32 = arith.constant 0 : i32
    %c0_i32_0 = arith.constant 0 : i32
    return %c0_i32, %arg0 : i32, i32
  }
  func.func @transform_2(%arg0: i32, %arg1: i32) -> (i32, i32) {
    %c0_i32 = arith.constant 0 : i32
    %c0_i32_0 = arith.constant 0 : i32
    return %c0_i32, %arg0 : i32, i32
  }
  func.func @transform_3(%arg0: i32, %arg1: i32) -> (i32, i32) {
    %c0_i32 = arith.constant 0 : i32
    %c0_i32_0 = arith.constant 0 : i32
    return %c0_i32, %arg0 : i32, i32
  }
  func.func @transform_4(%arg0: i32, %arg1: i32) -> (i32, i32) {
    %c0_i32 = arith.constant 0 : i32
    return %arg1, %arg0 : i32, i32
  }
  func.func @transform_5(%arg0: i32, %arg1: i32) -> (i32, i32) {
    %c0_i32 = arith.constant 0 : i32
    return %arg1, %arg0 : i32, i32
  }
}

</mosaic_0001>

<llo_original>
// kernel: c2b_forward.1
$region0: #{c2b_forward.1}
  #allocation0 [shape = 'u32[]', space=smem, size = 0x4, offset = 0x4, fixed_abs, tag = 'smem constant byte address 0x4 - core index']
  #allocation1 [shape = 'u32[144,128]{1,0:T(1,128)}', space=vmem, size = 0x12000, scoped, tag = 'internal scratch']
  %s0 = inlined_call_operand.vmem [shape: f32[2,16,256], index: 0, kind: input, shape index: {}]
  %s1 = inlined_call_operand.vmem [shape: bf16[16,256], index: 1, kind: input, shape index: {}]
  %s2 = inlined_call_operand.vmem [shape: f32[1,256], index: 2, kind: input, shape index: {}]
  %s3 = inlined_call_operand.vmem [shape: f32[1,256], index: 3, kind: input, shape index: {}]
  %s4 = inlined_call_operand.vmem [shape: f32[2,256], index: 4, kind: output, shape index: {0}]
  %s5 = inlined_call_operand.vmem [shape: f32[2,256], index: 5, kind: output, shape index: {1}]
  %6 = xla_tuple %s4, %s5
  %s7 = sld [smem:[#allocation0]]
  $region34: #{c2b_forward.1} parent=0
    _
  %s9 = ssub.s32 1, %s7
  %s10 = scalar_select 0, %s9, %s7
  // Predicated region
  $region2: #{c2b_forward.1} parent=0 // pred_check
    _
  $region3: #{c2b_forward.1} parent=0 // pred_check_branch
    %12 = sbr.rel (0) target = $region5
  $region4: #{c2b_forward.1} parent=0 // pred_region
    _
  $region5: #{c2b_forward.1} parent=0 // pred_fallthru
    _
  // Predicated region
  $region6: #{c2b_forward.1} parent=0 // pred_check
    _
  $region7: #{c2b_forward.1} parent=0 // pred_check_branch
    %14 = sbr.rel (0) target = $region9
  $region8: #{c2b_forward.1} parent=0 // pred_region
    _
  $region9: #{c2b_forward.1} parent=0 // pred_fallthru
    _
  // Predicated region
  $region10: #{c2b_forward.1} parent=0 // pred_check
    _
  $region11: #{c2b_forward.1} parent=0 // pred_check_branch
    %16 = sbr.rel (0) target = $region13
  $region12: #{c2b_forward.1} parent=0 // pred_region
    _
  $region13: #{c2b_forward.1} parent=0 // pred_fallthru
    _
  // Predicated region
  $region14: #{c2b_forward.1} parent=0 // pred_check
    _
  $region15: #{c2b_forward.1} parent=0 // pred_check_branch
    %18 = sbr.rel (0) target = $region17
  $region16: #{c2b_forward.1} parent=0 // pred_region
    _
  $region17: #{c2b_forward.1} parent=0 // pred_fallthru
    _
  %v22 = vld [vmem:[%s0] sm:$0xff]
  %v23 = vld [vmem:[%s0 + $0x8] sm:$0xff]
  %v24 = vld [vmem:[%s0 + $0x10] sm:$0xff]
  %v25 = vld [vmem:[%s0 + $0x18] sm:$0xff]
  %v26 = vld [vmem:[%s0 + $0x20] sm:$0xff]
  %v27 = vld [vmem:[%s0 + $0x28] sm:$0xff]
  %v28 = vld [vmem:[%s0 + $0x30] sm:$0xff]
  %v29 = vld [vmem:[%s0 + $0x38] sm:$0xff]
  %v30 = vld [vmem:[%s1] sm:$0xff]
  %v31 = vld [vmem:[%s1 + $0x8] sm:$0xff]
  %vm32 = vcmp.ne.bf16.partialorder %v30, 0
  %vm33 = vcmp.ne.bf16.partialorder %v31, 0
  %v34 = vsel %vm32, 65537, 0
  %v35 = vsel %vm33, 65537, 0
  %v36 = vunpack.c.l.b16 %v34
  %v37 = vunpack.c.h.b16 %v34
  %v38 = vunpack.c.l.b16 %v35
  %v39 = vunpack.c.h.b16 %v35
  %vm40 = vcmp.ne.s32.totalorder %v36, 0
  %vm41 = vcmp.ne.s32.totalorder %v37, 0
  %vm42 = vcmp.ne.s32.totalorder %v38, 0
  %vm43 = vcmp.ne.s32.totalorder %v39, 0
  %v44 = vsel %vm40, 1, 0
  %v45 = vsel %vm41, 1, 0
  %v46 = vsel %vm42, 1, 0
  %v47 = vsel %vm43, 1, 0
  %vm48 = vcmp.eq.s32.totalorder %v44, 1
  %vm49 = vcmp.eq.s32.totalorder %v45, 1
  %vm50 = vcmp.eq.s32.totalorder %v46, 1
  %vm51 = vcmp.eq.s32.totalorder %v47, 1
  %v52 = vsel %vm48, %v22, 0.0
  %v53 = vsel %vm49, %v23, 0.0
  %v54 = vsel %vm50, %v24, 0.0
  %v55 = vsel %vm51, %v25, 0.0
  %v56 = vsel %vm48, %v26, 0.0
  %v57 = vsel %vm49, %v27, 0.0
  %v58 = vsel %vm50, %v28, 0.0
  %v59 = vsel %vm51, %v29, 0.0
  %v60 = vadd.f32 %v52, %v54
  %v61 = vrot.slane %v60, 4
  %v62 = vadd.f32 %v60, %v61
  %v63 = vrot.slane %v62, 2
  %v64 = vadd.f32 %v62, %v63
  %v65 = vrot.slane %v64, 1
  %v66 = vadd.f32 %v64, %v65
  %v67 = vadd.f32 %v53, %v55
  %v68 = vrot.slane %v67, 4
  %v69 = vadd.f32 %v67, %v68
  %v70 = vrot.slane %v69, 2
  %v71 = vadd.f32 %v69, %v70
  %v72 = vrot.slane %v71, 1
  %v73 = vadd.f32 %v71, %v72
  %v74 = vadd.f32 %v56, %v58
  %v75 = vrot.slane %v74, 4
  %v76 = vadd.f32 %v74, %v75
  %v77 = vrot.slane %v76, 2
  %v78 = vadd.f32 %v76, %v77
  %v79 = vrot.slane %v78, 1
  %v80 = vadd.f32 %v78, %v79
  %v81 = vadd.f32 %v57, %v59
  %v82 = vrot.slane %v81, 4
  %v83 = vadd.f32 %v81, %v82
  %v84 = vrot.slane %v83, 2
  %v85 = vadd.f32 %v83, %v84
  %v86 = vrot.slane %v85, 1
  %v87 = vadd.f32 %v85, %v86
  %v88 = vsub.f32 %v22, %v52
  %v89 = vsub.f32 %v23, %v53
  %v90 = vsub.f32 %v24, %v54
  %v91 = vsub.f32 %v25, %v55
  %v92 = vsub.f32 %v26, %v56
  %v93 = vsub.f32 %v27, %v57
  %v94 = vsub.f32 %v28, %v58
  %v95 = vsub.f32 %v29, %v59
  %v96 = vadd.f32 %v88, %v90
  %v97 = vrot.slane %v96, 4
  %v98 = vadd.f32 %v96, %v97
  %v99 = vrot.slane %v98, 2
  %v100 = vadd.f32 %v98, %v99
  %v101 = vrot.slane %v100, 1
  %v102 = vadd.f32 %v100, %v101
  %v103 = vadd.f32 %v89, %v91
  %v104 = vrot.slane %v103, 4
  %v105 = vadd.f32 %v103, %v104
  %v106 = vrot.slane %v105, 2
  %v107 = vadd.f32 %v105, %v106
  %v108 = vrot.slane %v107, 1
  %v109 = vadd.f32 %v107, %v108
  %v110 = vadd.f32 %v92, %v94
  %v111 = vrot.slane %v110, 4
  %v112 = vadd.f32 %v110, %v111
  %v113 = vrot.slane %v112, 2
  %v114 = vadd.f32 %v112, %v113
  %v115 = vrot.slane %v114, 1
  %v116 = vadd.f32 %v114, %v115
  %v117 = vadd.f32 %v93, %v95
  %v118 = vrot.slane %v117, 4
  %v119 = vadd.f32 %v117, %v118
  %v120 = vrot.slane %v119, 2
  %v121 = vadd.f32 %v119, %v120
  %v122 = vrot.slane %v121, 1
  %v123 = vadd.f32 %v121, %v122
  %v124 = vld [vmem:[%s2] sm:$0x3]
  %v126 = vlaneseq
  %v127 = vshrl.u32 %v126, 7
  %v128 = vsub.s32 0, %v127
  %v129 = vrot.slane %v124, %v128
  %v130 = vlaneseq
  %v131 = vshrl.u32 %v130, 7
  %v132 = vsub.s32 1, %v131
  %v133 = vrot.slane %v124, %v132
  %v136 = vmul.f32 %v66, %v129
  %v137 = vmul.f32 %v73, %v133
  %v138 = vmul.f32 %v80, %v129
  %v139 = vmul.f32 %v87, %v133
  %v144 = vcombine.low %v136, %v137
  %v146 = vunpack.c.l.s4 1983009808
  %v147 = vunpack.c.0.s8 %v146
  %v148 = vlaneseq
  %v149 = vshrl.u32 %v148, 7
  %v150 = vsub.s32 %v147, %v149
  %v151 = vrot.slane %v144, %v150
  %v152 = vcombine.low %v138, %v139
  %v154 = vunpack.c.l.s4 1983009808
  %v155 = vunpack.c.0.s8 %v154
  %v156 = vlaneseq
  %v157 = vshrl.u32 %v156, 7
  %v158 = vsub.s32 %v155, %v157
  %v159 = vrot.slane %v152, %v158
  %vm160 = vcmask 1044484
  %v161 = vsel %vm160, %v151, %v151
  %vm162 = vcmask 1046534
  %v163 = vsel %vm162, %v151, %v161
  %v164 = vrot.slane %v159, 7
  %vm165 = vcmask 1041409
  %v166 = vsel %vm165, %v164, %v163
  %vm167 = vcmask 1043459
  %v168 = vsel %vm167, %v164, %v166
  %vm169 = vcmask 1045509
  %v170 = vsel %vm169, %v164, %v168
  %vm171 = vcmask 1047559
  %v172 = vsel %vm171, %v164, %v170
  %174 = vst [vmem:[%s4] sm:$0xf] %v172
  %v175 = vld [vmem:[%s3] sm:$0x3]
  %v177 = vlaneseq
  %v178 = vshrl.u32 %v177, 7
  %v179 = vsub.s32 0, %v178
  %v180 = vrot.slane %v175, %v179
  %v181 = vlaneseq
  %v182 = vshrl.u32 %v181, 7
  %v183 = vsub.s32 1, %v182
  %v184 = vrot.slane %v175, %v183
  %v187 = vmul.f32 %v102, %v180
  %v188 = vmul.f32 %v109, %v184
  %v189 = vmul.f32 %v116, %v180
  %v190 = vmul.f32 %v123, %v184
  %v195 = vcombine.low %v187, %v188
  %v197 = vunpack.c.l.s4 1983009808
  %v198 = vunpack.c.0.s8 %v197
  %v199 = vlaneseq
  %v200 = vshrl.u32 %v199, 7
  %v201 = vsub.s32 %v198, %v200
  %v202 = vrot.slane %v195, %v201
  %v203 = vcombine.low %v189, %v190
  %v205 = vunpack.c.l.s4 1983009808
  %v206 = vunpack.c.0.s8 %v205
  %v207 = vlaneseq
  %v208 = vshrl.u32 %v207, 7
  %v209 = vsub.s32 %v206, %v208
  %v210 = vrot.slane %v203, %v209
  %v211 = vsel %vm160, %v202, %v202
  %v212 = vsel %vm162, %v202, %v211
  %v213 = vrot.slane %v210, 7
  %v214 = vsel %vm165, %v213, %v212
  %v215 = vsel %vm167, %v213, %v214
  %v216 = vsel %vm169, %v213, %v215
  %v217 = vsel %vm171, %v213, %v216
  %219 = vst [vmem:[%s5] sm:$0xf] %v217
  // Predicated region
  $region18: #{c2b_forward.1} parent=0 // pred_check
    _
  $region19: #{c2b_forward.1} parent=0 // pred_check_branch
    %221 = sbr.rel (0) target = $region21
  $region20: #{c2b_forward.1} parent=0 // pred_region
    _
  $region21: #{c2b_forward.1} parent=0 // pred_fallthru
    _
  // Predicated region
  $region22: #{c2b_forward.1} parent=0 // pred_check
    _
  $region23: #{c2b_forward.1} parent=0 // pred_check_branch
    %223 = sbr.rel (0) target = $region25
  $region24: #{c2b_forward.1} parent=0 // pred_region
    _
  $region25: #{c2b_forward.1} parent=0 // pred_fallthru
    _
  // Predicated region
  $region26: #{c2b_forward.1} parent=0 // pred_check
    _
  $region27: #{c2b_forward.1} parent=0 // pred_check_branch
    %225 = sbr.rel (0) target = $region29
  $region28: #{c2b_forward.1} parent=0 // pred_region
    _
  $region29: #{c2b_forward.1} parent=0 // pred_fallthru
    _
  // Predicated region
  $region30: #{c2b_forward.1} parent=0 // pred_check
    _
  $region31: #{c2b_forward.1} parent=0 // pred_check_branch
    %227 = sbr.rel (0) target = $region33
  $region32: #{c2b_forward.1} parent=0 // pred_region
    _
  $region33: #{c2b_forward.1} parent=0 // pred_fallthru
    _

</llo_original>
